<compile_context>
chip_gen: v6e
topology: v6e:2x2x1
jax: 0.10.0
libtpu: 0.0.40
codegen_flags: <defaults>
</compile_context>

<pallas_src>
import jax
import jax.numpy as jnp
from jax import lax
from jax.experimental import pallas as pl
from jax.experimental.pallas import tpu as pltpu


def _make_resblock_kernel(B, H, WC):
    """Build the kernel for one (B, H, W*C) batch tile."""

    def kernel(x_ref, w1_ref, b1_ref, w2_ref, b2_ref, out_ref, pad1, pad2):
        # x_ref   : (B, H, W*C)        input tile (lane-dense)
        # w*_ref  : (3*W*C, W*C)       banded conv weights (width padding folded in)
        # b*_ref  : (1, W*C)           bias tiled over x positions
        # out_ref : (B, H, W*C)
        # pad1/2  : (B, H+2, W*C) f32  height-padded activations (VMEM scratch)
        zrow = jnp.zeros((B, 1, WC), jnp.float32)

        # Zero only the two halo rows; the interior is fully overwritten every
        # step.  Done each step (not under pl.program_id(0)==0) so results stay
        # correct when the parallel grid axis is sharded across TensorCores.
        pad1[:, 0:1, :] = zrow
        pad1[:, H + 1:H + 2, :] = zrow
        pad2[:, 0:1, :] = zrow
        pad2[:, H + 1:H + 2, :] = zrow

        x = x_ref[...].astype(jnp.float32)                 # (B, H, WC)

        # ---- ReLU(x), height-padded (zero padding is ReLU-invariant) ----
        pad1[:, 1:H + 1, :] = jnp.maximum(x, 0.0)

        # ---- conv1: one matmul, K = 3*W*C ----
        rows1 = jnp.concatenate(
            [pad1[:, dy:dy + H, :] for dy in range(3)], axis=-1
        ).reshape(B * H, 3 * WC)
        h1 = jnp.dot(rows1, w1_ref[...],
                     preferred_element_type=jnp.float32) + b1_ref[...]

        # ---- ReLU + height-pad the intermediate ----
        pad2[:, 1:H + 1, :] = jnp.maximum(h1, 0.0).reshape(B, H, WC)

        # ---- conv2: one matmul ----
        rows2 = jnp.concatenate(
            [pad2[:, dy:dy + H, :] for dy in range(3)], axis=-1
        ).reshape(B * H, 3 * WC)
        h2 = jnp.dot(rows2, w2_ref[...],
                     preferred_element_type=jnp.float32) + b2_ref[...]

        # ---- residual add, lane-dense store ----
        out = x.reshape(B * H, WC) + h2
        out_ref[...] = out.reshape(B, H, WC).astype(out_ref.dtype)

    return kernel


def _band_conv_weights(w_hwio, W):
    """(3, 3, Cin, Cout) HWIO -> (3*W*Cin, W*Cout) banded row-conv matrix.

    band[dy*W*Cin + p*Cin + ci, q*Cout + co] = w[dy, p - q + 1, ci, co]
    and 0 when (p - q + 1) is outside [0, 3) -- this realizes the W-direction
    zero padding, so the kernel only needs a height halo.
    """
    kh, kw, Cin, Cout = w_hwio.shape
    # S[dx, p, q] = 1  iff  p == q + dx - 1   (shifted identity, edges dropped)
    S = jnp.stack([jnp.eye(W, W, k=1 - dx, dtype=w_hwio.dtype)
                   for dx in range(kw)])
    band = jnp.einsum('xpq,yxio->ypiqo', S, w_hwio)        # (3, W, Cin, W, Cout)
    return band.reshape(kh * W * Cin, W * Cout)


def _pick_b_tile(N):
    # Largest batch tile that still leaves >= 2 grid steps (v7x megacore),
    # amortizing the per-grid-step overhead for larger batches.
    for bt in range(max(1, N // 2), 0, -1):
        if N % bt == 0:
            return bt
    return 1


def residual_block_nhwc(x_nhwc, w1, b1, w2, b2, *, b_tile=None):
    """x_nhwc: (N, H, W, C) f32; w: (3, 3, C, C) HWIO; b: (C,)."""
    N, H, W, C = x_nhwc.shape
    WC = W * C
    if b_tile is None:
        b_tile = _pick_b_tile(N)
    assert N % b_tile == 0, "batch must be divisible by b_tile"

    # Lane-dense views (free reshape, identical memory order).
    x_flat = x_nhwc.reshape(N, H, WC)
    w1b = _band_conv_weights(w1, W).astype(jnp.float32)    # (3*WC, WC)
    w2b = _band_conv_weights(w2, W).astype(jnp.float32)
    b1t = jnp.tile(b1, W).reshape(1, WC).astype(jnp.float32)
    b2t = jnp.tile(b2, W).reshape(1, WC).astype(jnp.float32)

    kernel = _make_resblock_kernel(b_tile, H, WC)

    y_flat = pl.pallas_call(
        kernel,
        out_shape=jax.ShapeDtypeStruct((N, H, WC), x_nhwc.dtype),
        grid_spec=pltpu.PrefetchScalarGridSpec(
            num_scalar_prefetch=0,
            grid=(N // b_tile,),
            in_specs=[
                pl.BlockSpec((b_tile, H, WC), lambda n: (n, 0, 0)),   # x
                pl.BlockSpec((3 * WC, WC), lambda n: (0, 0)),         # w1 band
                pl.BlockSpec((1, WC), lambda n: (0, 0)),              # b1
                pl.BlockSpec((3 * WC, WC), lambda n: (0, 0)),         # w2 band
                pl.BlockSpec((1, WC), lambda n: (0, 0)),              # b2
            ],
            out_specs=pl.BlockSpec((b_tile, H, WC), lambda n: (n, 0, 0)),
            scratch_shapes=[
                pltpu.VMEM((b_tile, H + 2, WC), jnp.float32),  # padded relu(x)
                pltpu.VMEM((b_tile, H + 2, WC), jnp.float32),  # padded relu(h1)
            ],
        ),
        compiler_params=pltpu.CompilerParams(
            dimension_semantics=("parallel",)),
    )(x_flat, w1b, b1t, w2b, b2t)

    return y_flat.reshape(N, H, W, C)


def residual_block_nchw(x_nchw, w1, b1, w2, b2):
    """PyTorch-convention entry point: x is NCHW, returns NCHW.

    Prefer keeping activations NHWC end-to-end in a real model; this wrapper
    pays two XLA transposes only for PyTorch layout compatibility.
    """
    x_nhwc = jnp.transpose(x_nchw, (0, 2, 3, 1))
    y_nhwc = residual_block_nhwc(x_nhwc, w1, b1, w2, b2)
    return jnp.transpose(y_nhwc, (0, 3, 1, 2))


def _reference_nhwc(x, w1, b1, w2, b2):
    """Pure-JAX reference (same math, for correctness check)."""
    dn = ("NHWC", "HWIO", "NHWC")
    h = jnp.maximum(x, 0.0)
    h = lax.conv_general_dilated(h, w1, (1, 1), "SAME", dimension_numbers=dn) + b1
    h = jnp.maximum(h, 0.0)
    h = lax.conv_general_dilated(h, w2, (1, 1), "SAME", dimension_numbers=dn) + b2
    return x + h


if __name__ == "__main__":
    N, C, H, W = 2, 4, 16, 16

    key = jax.random.PRNGKey(0)
    kx, kw1, kb1, kw2, kb2 = jax.random.split(key, 5)

    # Deterministic synthetic parameters (shapes match nn.Conv2d(ch, ch, 3, 1, 1)).
    # Stored as HWIO = (kh, kw, Cin, Cout); biases (Cout,).
    fan_in = 3 * 3 * C
    w1 = jax.random.normal(kw1, (3, 3, C, C), jnp.float32) * (2.0 / fan_in) ** 0.5
    b1 = jax.random.normal(kb1, (C,), jnp.float32) * 0.01
    w2 = jax.random.normal(kw2, (3, 3, C, C), jnp.float32) * (2.0 / fan_in) ** 0.5
    b2 = jax.random.normal(kb2, (C,), jnp.float32) * 0.01

    # Input in PyTorch NCHW convention.
    x = jax.random.normal(kx, (N, C, H, W), jnp.float32)

    y = residual_block_nchw(x, w1, b1, w2, b2)
    y = jax.block_until_ready(y)

    # Check against a pure-JAX reference.
    x_nhwc = jnp.transpose(x, (0, 2, 3, 1))
    y_ref = jnp.transpose(_reference_nhwc(x_nhwc, w1, b1, w2, b2), (0, 3, 1, 2))
    assert y.shape == (N, C, H, W)
    assert jnp.allclose(y, y_ref, atol=5e-4, rtol=5e-4), "mismatch vs reference"

    print("KERNEL_OK")
</pallas_src>

<mosaic_0001>
module attributes {stable_mosaic.version = 11 : i64} {
  func.func @kernel(%arg0: i32, %arg1: memref<1x16x64xf32, #tpu.memory_space<vmem>>, %arg2: memref<192x64xf32, #tpu.memory_space<vmem>>, %arg3: memref<1x64xf32, #tpu.memory_space<vmem>>, %arg4: memref<192x64xf32, #tpu.memory_space<vmem>>, %arg5: memref<1x64xf32, #tpu.memory_space<vmem>>, %arg6: memref<1x16x64xf32, #tpu.memory_space<vmem>>, %arg7: memref<1x18x64xf32, #tpu.memory_space<vmem>>, %arg8: memref<1x18x64xf32, #tpu.memory_space<vmem>>) attributes {dimension_semantics = [#tpu.dimension_semantics<parallel>], iteration_bounds = array<i64: 2>, scalar_prefetch = 0 : i64, scratch_operands = 2 : i64, tpu.core_type = #tpu.core_type<tc>, window_params = [{transform_indices = @transform_0, window_bounds = array<i64: 1, 16, 64>}, {pipeline_mode = #tpu.pipeline_mode<synchronous>, transform_indices = @transform_1, window_bounds = array<i64: 192, 64>}, {pipeline_mode = #tpu.pipeline_mode<synchronous>, transform_indices = @transform_2, window_bounds = array<i64: 1, 64>}, {pipeline_mode = #tpu.pipeline_mode<synchronous>, transform_indices = @transform_3, window_bounds = array<i64: 192, 64>}, {pipeline_mode = #tpu.pipeline_mode<synchronous>, transform_indices = @transform_4, window_bounds = array<i64: 1, 64>}, {transform_indices = @transform_5, window_bounds = array<i64: 1, 16, 64>}]} {
    %cst = arith.constant 0.000000e+00 : f32
    %0 = vector.broadcast %cst : f32 to vector<1x1x64xf32>
    %c0 = arith.constant 0 : index
    %c0_0 = arith.constant 0 : index
    %c0_1 = arith.constant 0 : index
    %1 = vector.load %arg7[%c0, %c0_0, %c0_1] : memref<1x18x64xf32, #tpu.memory_space<vmem>>, vector<1x1x64xf32>
    tpu.vector_store %arg7[%c0, %c0_0, %c0_1], %0 {strides = array<i32>} : memref<1x18x64xf32, #tpu.memory_space<vmem>>, vector<1x1x64xf32>,
    %c0_2 = arith.constant 0 : index
    %c17 = arith.constant 17 : index
    %c0_3 = arith.constant 0 : index
    %2 = vector.load %arg7[%c0_2, %c17, %c0_3] : memref<1x18x64xf32, #tpu.memory_space<vmem>>, vector<1x1x64xf32>
    tpu.vector_store %arg7[%c0_2, %c17, %c0_3], %0 {strides = array<i32>} : memref<1x18x64xf32, #tpu.memory_space<vmem>>, vector<1x1x64xf32>,
    %c0_4 = arith.constant 0 : index
    %c0_5 = arith.constant 0 : index
    %c0_6 = arith.constant 0 : index
    %3 = vector.load %arg8[%c0_4, %c0_5, %c0_6] : memref<1x18x64xf32, #tpu.memory_space<vmem>>, vector<1x1x64xf32>
    tpu.vector_store %arg8[%c0_4, %c0_5, %c0_6], %0 {strides = array<i32>} : memref<1x18x64xf32, #tpu.memory_space<vmem>>, vector<1x1x64xf32>,
    %c0_7 = arith.constant 0 : index
    %c17_8 = arith.constant 17 : index
    %c0_9 = arith.constant 0 : index
    %4 = vector.load %arg8[%c0_7, %c17_8, %c0_9] : memref<1x18x64xf32, #tpu.memory_space<vmem>>, vector<1x1x64xf32>
    tpu.vector_store %arg8[%c0_7, %c17_8, %c0_9], %0 {strides = array<i32>} : memref<1x18x64xf32, #tpu.memory_space<vmem>>, vector<1x1x64xf32>,
    %c0_10 = arith.constant 0 : index
    %c0_11 = arith.constant 0 : index
    %c0_12 = arith.constant 0 : index
    %5 = vector.load %arg1[%c0_10, %c0_11, %c0_12] : memref<1x16x64xf32, #tpu.memory_space<vmem>>, vector<1x16x64xf32>
    %cst_13 = arith.constant 0.000000e+00 : f32
    %6 = vector.broadcast %cst_13 : f32 to vector<1x16x64xf32>
    %7 = arith.maximumf %5, %6 : vector<1x16x64xf32>
    %c0_14 = arith.constant 0 : index
    %c1 = arith.constant 1 : index
    %c0_15 = arith.constant 0 : index
    %8 = vector.load %arg7[%c0_14, %c1, %c0_15] : memref<1x18x64xf32, #tpu.memory_space<vmem>>, vector<1x16x64xf32>
    tpu.vector_store %arg7[%c0_14, %c1, %c0_15], %7 {strides = array<i32>} : memref<1x18x64xf32, #tpu.memory_space<vmem>>, vector<1x16x64xf32>,
    %c0_16 = arith.constant 0 : index
    %c0_17 = arith.constant 0 : index
    %c0_18 = arith.constant 0 : index
    %9 = vector.load %arg7[%c0_16, %c0_17, %c0_18] : memref<1x18x64xf32, #tpu.memory_space<vmem>>, vector<1x16x64xf32>
    %c0_19 = arith.constant 0 : index
    %c1_20 = arith.constant 1 : index
    %c0_21 = arith.constant 0 : index
    %10 = vector.load %arg7[%c0_19, %c1_20, %c0_21] : memref<1x18x64xf32, #tpu.memory_space<vmem>>, vector<1x16x64xf32>
    %c0_22 = arith.constant 0 : index
    %c2 = arith.constant 2 : index
    %c0_23 = arith.constant 0 : index
    %11 = vector.load %arg7[%c0_22, %c2, %c0_23] : memref<1x18x64xf32, #tpu.memory_space<vmem>>, vector<1x16x64xf32>
    %12 = tpu.concatenate %9, %10, %11 in 2 : vector<1x16x64xf32>, vector<1x16x64xf32>, vector<1x16x64xf32> -> vector<1x16x192xf32>
    %13 = vector.shape_cast %12 : vector<1x16x192xf32> to vector<16x192xf32>
    %c0_24 = arith.constant 0 : index
    %c0_25 = arith.constant 0 : index
    %14 = vector.load %arg2[%c0_24, %c0_25] : memref<192x64xf32, #tpu.memory_space<vmem>>, vector<192x64xf32>
    %cst_26 = arith.constant dense<0.000000e+00> : vector<16x64xf32>
    %15 = tpu.matmul %13, %14, %cst_26 {dimension_numbers = #tpu.dot_dimension_numbers<[1], [0], [0], [1], [0, 0, 1, 1], [], []>} : vector<16x192xf32>, vector<192x64xf32>, vector<16x64xf32> -> vector<16x64xf32>
    %c0_27 = arith.constant 0 : index
    %c0_28 = arith.constant 0 : index
    %16 = vector.load %arg3[%c0_27, %c0_28] : memref<1x64xf32, #tpu.memory_space<vmem>>, vector<1x64xf32>
    %17 = vector.broadcast %16 : vector<1x64xf32> to vector<16x64xf32>
    %18 = arith.addf %15, %17 : vector<16x64xf32>
    %cst_29 = arith.constant 0.000000e+00 : f32
    %19 = vector.broadcast %cst_29 : f32 to vector<16x64xf32>
    %20 = arith.maximumf %18, %19 : vector<16x64xf32>
    %21 = vector.shape_cast %20 : vector<16x64xf32> to vector<1x16x64xf32>
    %c0_30 = arith.constant 0 : index
    %c1_31 = arith.constant 1 : index
    %c0_32 = arith.constant 0 : index
    %22 = vector.load %arg8[%c0_30, %c1_31, %c0_32] : memref<1x18x64xf32, #tpu.memory_space<vmem>>, vector<1x16x64xf32>
    tpu.vector_store %arg8[%c0_30, %c1_31, %c0_32], %21 {strides = array<i32>} : memref<1x18x64xf32, #tpu.memory_space<vmem>>, vector<1x16x64xf32>,
    %c0_33 = arith.constant 0 : index
    %c0_34 = arith.constant 0 : index
    %c0_35 = arith.constant 0 : index
    %23 = vector.load %arg8[%c0_33, %c0_34, %c0_35] : memref<1x18x64xf32, #tpu.memory_space<vmem>>, vector<1x16x64xf32>
    %c0_36 = arith.constant 0 : index
    %c1_37 = arith.constant 1 : index
    %c0_38 = arith.constant 0 : index
    %24 = vector.load %arg8[%c0_36, %c1_37, %c0_38] : memref<1x18x64xf32, #tpu.memory_space<vmem>>, vector<1x16x64xf32>
    %c0_39 = arith.constant 0 : index
    %c2_40 = arith.constant 2 : index
    %c0_41 = arith.constant 0 : index
    %25 = vector.load %arg8[%c0_39, %c2_40, %c0_41] : memref<1x18x64xf32, #tpu.memory_space<vmem>>, vector<1x16x64xf32>
    %26 = tpu.concatenate %23, %24, %25 in 2 : vector<1x16x64xf32>, vector<1x16x64xf32>, vector<1x16x64xf32> -> vector<1x16x192xf32>
    %27 = vector.shape_cast %26 : vector<1x16x192xf32> to vector<16x192xf32>
    %c0_42 = arith.constant 0 : index
    %c0_43 = arith.constant 0 : index
    %28 = vector.load %arg4[%c0_42, %c0_43] : memref<192x64xf32, #tpu.memory_space<vmem>>, vector<192x64xf32>
    %cst_44 = arith.constant dense<0.000000e+00> : vector<16x64xf32>
    %29 = tpu.matmul %27, %28, %cst_44 {dimension_numbers = #tpu.dot_dimension_numbers<[1], [0], [0], [1], [0, 0, 1, 1], [], []>} : vector<16x192xf32>, vector<192x64xf32>, vector<16x64xf32> -> vector<16x64xf32>
    %c0_45 = arith.constant 0 : index
    %c0_46 = arith.constant 0 : index
    %30 = vector.load %arg5[%c0_45, %c0_46] : memref<1x64xf32, #tpu.memory_space<vmem>>, vector<1x64xf32>
    %31 = vector.broadcast %30 : vector<1x64xf32> to vector<16x64xf32>
    %32 = arith.addf %29, %31 : vector<16x64xf32>
    %33 = vector.shape_cast %5 : vector<1x16x64xf32> to vector<16x64xf32>
    %34 = arith.addf %33, %32 : vector<16x64xf32>
    %35 = vector.shape_cast %34 : vector<16x64xf32> to vector<1x16x64xf32>
    %c0_47 = arith.constant 0 : index
    %c0_48 = arith.constant 0 : index
    %c0_49 = arith.constant 0 : index
    %36 = vector.load %arg6[%c0_47, %c0_48, %c0_49] : memref<1x16x64xf32, #tpu.memory_space<vmem>>, vector<1x16x64xf32>
    tpu.vector_store %arg6[%c0_47, %c0_48, %c0_49], %35 {strides = array<i32>} : memref<1x16x64xf32, #tpu.memory_space<vmem>>, vector<1x16x64xf32>,
    return
  }
  func.func @transform_0(%arg0: i32) -> (i32, i32, i32) {
    %c0_i32 = arith.constant 0 : i32
    %c0_i32_0 = arith.constant 0 : i32
    %c0_i32_1 = arith.constant 0 : i32
    return %arg0, %c0_i32, %c0_i32_0 : i32, i32, i32
  }
  func.func @transform_1(%arg0: i32) -> (i32, i32) {
    %c0_i32 = arith.constant 0 : i32
    %c0_i32_0 = arith.constant 0 : i32
    %c0_i32_1 = arith.constant 0 : i32
    return %c0_i32, %c0_i32_0 : i32, i32
  }
  func.func @transform_2(%arg0: i32) -> (i32, i32) {
    %c0_i32 = arith.constant 0 : i32
    %c0_i32_0 = arith.constant 0 : i32
    %c0_i32_1 = arith.constant 0 : i32
    return %c0_i32, %c0_i32_0 : i32, i32
  }
  func.func @transform_3(%arg0: i32) -> (i32, i32) {
    %c0_i32 = arith.constant 0 : i32
    %c0_i32_0 = arith.constant 0 : i32
    %c0_i32_1 = arith.constant 0 : i32
    return %c0_i32, %c0_i32_0 : i32, i32
  }
  func.func @transform_4(%arg0: i32) -> (i32, i32) {
    %c0_i32 = arith.constant 0 : i32
    %c0_i32_0 = arith.constant 0 : i32
    %c0_i32_1 = arith.constant 0 : i32
    return %c0_i32, %c0_i32_0 : i32, i32
  }
  func.func @transform_5(%arg0: i32) -> (i32, i32, i32) {
    %c0_i32 = arith.constant 0 : i32
    %c0_i32_0 = arith.constant 0 : i32
    %c0_i32_1 = arith.constant 0 : i32
    return %arg0, %c0_i32, %c0_i32_0 : i32, i32, i32
  }
}

</mosaic_0001>

<llo_original>
// kernel: tpu_custom_call.1
$region0: #{tpu_custom_call.1}
  #allocation0 [shape = 'u32[]', space=smem, size = 0x4, offset = 0x4, fixed_abs, tag = 'smem constant byte address 0x4 - core index']
  #allocation1 [shape = 'u32[144,128]{1,0:T(1,128)}', space=vmem, size = 0x12000, scoped, tag = 'internal scratch']
  #allocation2 [shape = 'f32[1,18,64]{2,1,0:T(8,128)}', space=vmem, size = 0x3000, scoped, tag = 'scratch operand']
  #allocation3 [shape = 'f32[1,18,64]{2,1,0:T(8,128)}', space=vmem, size = 0x3000, scoped, tag = 'scratch operand']
  %s0 = inlined_call_operand.vmem [shape: f32[2,16,64], index: 0, kind: input, shape index: {}]
  %s1 = inlined_call_operand.vmem [shape: f32[192,64], index: 1, kind: input, shape index: {}]
  %s2 = inlined_call_operand.vmem [shape: f32[1,64], index: 2, kind: input, shape index: {}]
  %s3 = inlined_call_operand.vmem [shape: f32[192,64], index: 3, kind: input, shape index: {}]
  %s4 = inlined_call_operand.vmem [shape: f32[1,64], index: 4, kind: input, shape index: {}]
  %s5 = inlined_call_operand.hbm [shape: f32[2,16,64], index: 5, kind: output, shape index: {}]
  %s6 = sld [smem:[#allocation0]]
  $region53: #{tpu_custom_call.1} parent=0
    _
  %s8 = ssub.s32 1, %s6
  %s9 = scalar_select 0, %s8, %s6
  $region1: #{tpu_custom_call.1} parent=0
    #allocation4 [shape = 'u8[16384]{0}', space=vmem, size = 0x4000, scoped, tag = 'output window, operand 0']
    #allocation5 [shape = 's32[2]{0}', space=sflag, size = 0x8, scoped, tag = 'scoped memory for tpu_custom_call.1']
    %10 = vsyncpa [#allocation5], 0
    %s11 = scalar_lea.sflag [#allocation5], 1
    %12 = vsyncpa %s11, 0
    loop: start=0, step=1, limit=4
    $region2: #{tpu_custom_call.1} parent=1 // loop_pre_header
      _
    $region3: #{tpu_custom_call.1} parent=1 // loop_header
      %s14 = sphi 0, %s18
      %p15 = scmp.ge.s32.totalorder %s14, 4
      %s24 = sphi 0, %s26
      %s27 = sphi 0, %s24
      %s28 = sphi 0, %s27
      %s44 = sphi 0, %s28
      %s48 = sphi 0, %s48
      %s50 = sphi 0, %s48
      %s51 = sphi 0, %s50
      %s65 = sphi 0, %s51
      %s69 = sphi 0, %s69
      %s71 = sphi 0, %s69
      %s72 = sphi 0, %s71
      %s86 = sphi 0, %s72
      %s90 = sphi 0, %s90
      %s92 = sphi 0, %s90
      %s93 = sphi 0, %s92
      %s107 = sphi 0, %s93
      %s111 = sphi 0, %s111
      %s113 = sphi 0, %s111
      %s114 = sphi 0, %s113
      %s128 = sphi 0, %s114
      %s134 = sphi 0, %s136
      %s137 = sphi 0, %s134
      %s138 = sphi 0, %s137
      %s154 = sphi 0, %s138
    $region4: #{tpu_custom_call.1} parent=1 // loop_header_branch
      %17 = sbr.rel (%p15) target = $region8
    $region5: #{tpu_custom_call.1} parent=1 // loop_body
      %s19 = ssub.s32 %s14, 1
      %s20 = ssub.s32 %s14, 2
      %s21 = sadd.s32 %s14, 1
      %s22 = ssub.s32 %s14, %s21
      %p23 = scmp.eq.s32.totalorder %s22, 0
      %s25 = sadd.s32 %s24, 1
      %s26 = scalar_select %p23, %s24, %s25
      %p29 = pneg %p23
      %p30 = scmp.eq.s32.totalorder %s14, 1
      %p31 = por %p29, %p30
      %p32 = scmp.ne.s32.totalorder %s24, %s27
      %p33 = scmp.eq.s32.totalorder %s14, 0
      %p34 = por %p32, %p33
      %p35 = scmp.ne.s32.totalorder %s24, %s27
      %p36 = scmp.eq.s32.totalorder %s19, 1
      %p37 = por %p35, %p36
      %p38 = scmp.ne.s32.totalorder %s27, %s28
      %p39 = scmp.eq.s32.totalorder %s19, 0
      %p40 = por %p38, %p39
      %p41 = scmp.ne.s32.totalorder %s27, %s28
      %p42 = scmp.eq.s32.totalorder %s20, 1
      %p43 = por %p41, %p42
      %p45 = scmp.ne.s32.totalorder %s28, %s44
      %p46 = scmp.eq.s32.totalorder %s20, 0
      %p47 = por %p45, %p46
      %s49 = sadd.s32 %s48, 1
      %p52 = scmp.eq.s32.totalorder %s14, 1
      %p53 = scmp.ne.s32.totalorder %s48, %s50
      %p54 = scmp.eq.s32.totalorder %s14, 0
      %p55 = por %p53, %p54
      %p56 = scmp.ne.s32.totalorder %s48, %s50
      %p57 = scmp.eq.s32.totalorder %s19, 1
      %p58 = por %p56, %p57
      %p59 = scmp.ne.s32.totalorder %s50, %s51
      %p60 = scmp.eq.s32.totalorder %s19, 0
      %p61 = por %p59, %p60
      %p62 = scmp.ne.s32.totalorder %s50, %s51
      %p63 = scmp.eq.s32.totalorder %s20, 1
      %p64 = por %p62, %p63
      %p66 = scmp.ne.s32.totalorder %s51, %s65
      %p67 = scmp.eq.s32.totalorder %s20, 0
      %p68 = por %p66, %p67
      %s70 = sadd.s32 %s69, 1
      %p73 = scmp.eq.s32.totalorder %s14, 1
      %p74 = scmp.ne.s32.totalorder %s69, %s71
      %p75 = scmp.eq.s32.totalorder %s14, 0
      %p76 = por %p74, %p75
      %p77 = scmp.ne.s32.totalorder %s69, %s71
      %p78 = scmp.eq.s32.totalorder %s19, 1
      %p79 = por %p77, %p78
      %p80 = scmp.ne.s32.totalorder %s71, %s72
      %p81 = scmp.eq.s32.totalorder %s19, 0
      %p82 = por %p80, %p81
      %p83 = scmp.ne.s32.totalorder %s71, %s72
      %p84 = scmp.eq.s32.totalorder %s20, 1
      %p85 = por %p83, %p84
      %p87 = scmp.ne.s32.totalorder %s72, %s86
      %p88 = scmp.eq.s32.totalorder %s20, 0
      %p89 = por %p87, %p88
      %s91 = sadd.s32 %s90, 1
      %p94 = scmp.eq.s32.totalorder %s14, 1
      %p95 = scmp.ne.s32.totalorder %s90, %s92
      %p96 = scmp.eq.s32.totalorder %s14, 0
      %p97 = por %p95, %p96
      %p98 = scmp.ne.s32.totalorder %s90, %s92
      %p99 = scmp.eq.s32.totalorder %s19, 1
      %p100 = por %p98, %p99
      %p101 = scmp.ne.s32.totalorder %s92, %s93
      %p102 = scmp.eq.s32.totalorder %s19, 0
      %p103 = por %p101, %p102
      %p104 = scmp.ne.s32.totalorder %s92, %s93
      %p105 = scmp.eq.s32.totalorder %s20, 1
      %p106 = por %p104, %p105
      %p108 = scmp.ne.s32.totalorder %s93, %s107
      %p109 = scmp.eq.s32.totalorder %s20, 0
      %p110 = por %p108, %p109
      %s112 = sadd.s32 %s111, 1
      %p115 = scmp.eq.s32.totalorder %s14, 1
      %p116 = scmp.ne.s32.totalorder %s111, %s113
      %p117 = scmp.eq.s32.totalorder %s14, 0
      %p118 = por %p116, %p117
      %p119 = scmp.ne.s32.totalorder %s111, %s113
      %p120 = scmp.eq.s32.totalorder %s19, 1
      %p121 = por %p119, %p120
      %p122 = scmp.ne.s32.totalorder %s113, %s114
      %p123 = scmp.eq.s32.totalorder %s19, 0
      %p124 = por %p122, %p123
      %p125 = scmp.ne.s32.totalorder %s113, %s114
      %p126 = scmp.eq.s32.totalorder %s20, 1
      %p127 = por %p125, %p126
      %p129 = scmp.ne.s32.totalorder %s114, %s128
      %p130 = scmp.eq.s32.totalorder %s20, 0
      %p131 = por %p129, %p130
      %s132 = ssub.s32 %s14, %s21
      %p133 = scmp.eq.s32.totalorder %s132, 0
      %s135 = sadd.s32 %s134, 1
      %s136 = scalar_select %p133, %s134, %s135
      %p139 = pneg %p133
      %p140 = scmp.eq.s32.totalorder %s14, 1
      %p141 = por %p139, %p140
      %p142 = scmp.ne.s32.totalorder %s134, %s137
      %p143 = scmp.eq.s32.totalorder %s14, 0
      %p144 = por %p142, %p143
      %p145 = scmp.ne.s32.totalorder %s134, %s137
      %p146 = scmp.eq.s32.totalorder %s19, 1
      %p147 = por %p145, %p146
      %p148 = scmp.ne.s32.totalorder %s137, %s138
      %p149 = scmp.eq.s32.totalorder %s19, 0
      %p150 = por %p148, %p149
      %p151 = scmp.ne.s32.totalorder %s137, %s138
      %p152 = scmp.eq.s32.totalorder %s20, 1
      %p153 = por %p151, %p152
      %p155 = scmp.ne.s32.totalorder %s138, %s154
      %p156 = scmp.eq.s32.totalorder %s20, 0
      %p157 = por %p155, %p156
      %p158 = scmp.le.s32.totalorder 1, %s14
      %p159 = scmp.lt.s32.totalorder %s14, 3
      %p160 = pnand %p158, %p159
      %p161 = pneg %p160
      // Predicated region
      $region9: #{tpu_custom_call.1} parent=5 // pred_check
        _
      $region10: #{tpu_custom_call.1} parent=5 // pred_check_branch
        %163 = sbr.rel (%p160) target = $region12
      $region11: #{tpu_custom_call.1} parent=5 // pred_region
        %s164 = ssub.s32 %s14, 1
        // Predicated region
        $region13: #{tpu_custom_call.1} parent=11 // pred_check
          %p165 = pneg %p61
        $region14: #{tpu_custom_call.1} parent=11 // pred_check_branch
          %167 = sbr.rel (%p165) target = $region16
        $region15: #{tpu_custom_call.1} parent=11 // pred_region
          _
        $region16: #{tpu_custom_call.1} parent=11 // pred_fallthru
          _
        // Predicated region
        $region17: #{tpu_custom_call.1} parent=11 // pred_check
          %p168 = pneg %p82
        $region18: #{tpu_custom_call.1} parent=11 // pred_check_branch
          %170 = sbr.rel (%p168) target = $region20
        $region19: #{tpu_custom_call.1} parent=11 // pred_region
          _
        $region20: #{tpu_custom_call.1} parent=11 // pred_fallthru
          _
        // Predicated region
        $region21: #{tpu_custom_call.1} parent=11 // pred_check
          %p171 = pneg %p103
        $region22: #{tpu_custom_call.1} parent=11 // pred_check_branch
          %173 = sbr.rel (%p171) target = $region24
        $region23: #{tpu_custom_call.1} parent=11 // pred_region
          _
        $region24: #{tpu_custom_call.1} parent=11 // pred_fallthru
          _
        // Predicated region
        $region25: #{tpu_custom_call.1} parent=11 // pred_check
          %p174 = pneg %p124
        $region26: #{tpu_custom_call.1} parent=11 // pred_check_branch
          %176 = sbr.rel (%p174) target = $region28
        $region27: #{tpu_custom_call.1} parent=11 // pred_region
          _
        $region28: #{tpu_custom_call.1} parent=11 // pred_fallthru
          _
      $region12: #{tpu_custom_call.1} parent=5 // pred_fallthru
        _
      %p177 = scmp.lt.s32.totalorder %s14, 2
      // Predicated region
      $region29: #{tpu_custom_call.1} parent=5 // pred_check
        %p178 = pneg %p177
      $region30: #{tpu_custom_call.1} parent=5 // pred_check_branch
        %180 = sbr.rel (%p178) target = $region32
      $region31: #{tpu_custom_call.1} parent=5 // pred_region
        // Predicated region
        $region33: #{tpu_custom_call.1} parent=31 // pred_check
          %p181 = pneg %p34
        $region34: #{tpu_custom_call.1} parent=31 // pred_check_branch
          %183 = sbr.rel (%p181) target = $region36
        $region35: #{tpu_custom_call.1} parent=31 // pred_region
          %p184 = scmp.lt.s32.totalorder %s14, 1
          %s185 = scalar_select %p184, %s14, 1
          %s186 = smul.addr %s185, 2
          %s187 = smul.addr %s186, 8
          %s188 = scalar_lea.vmem %s0, %s187
        $region36: #{tpu_custom_call.1} parent=31 // pred_fallthru
          _
      $region32: #{tpu_custom_call.1} parent=5 // pred_fallthru
        _
      %p189 = scmp.le.s32.totalorder 1, %s14
      %p190 = scmp.lt.s32.totalorder %s14, 3
      %p191 = pnand %p189, %p190
      %p192 = pneg %p191
      // Predicated region
      $region37: #{tpu_custom_call.1} parent=5 // pred_check
        _
      $region38: #{tpu_custom_call.1} parent=5 // pred_check_branch
        %194 = sbr.rel (%p191) target = $region40
      $region39: #{tpu_custom_call.1} parent=5 // pred_region
        %s195 = ssub.s32 %s14, 1
        %p196 = scmp.lt.s32.totalorder %s19, 1
        %s197 = scalar_select %p196, %s19, 1
        %s198 = smul.addr %s197, 2
        %s199 = smul.addr %s198, 8
        %s200 = scalar_lea.vmem %s0, %s199
        %p201 = pneg %p40
        %p202 = pneg %p37
        %p203 = pneg %p61
        %p204 = pneg %p58
        %p205 = pneg %p82
        %p206 = pneg %p79
        %p207 = pneg %p103
        %p208 = pneg %p100
        %p209 = pneg %p124
        %p210 = pneg %p121
        %p211 = pneg %p150
        %p212 = pneg %p147
        %s213 = sand.u32 %s137, 1
        %s214 = scalar_lea.sflag [#allocation5], %s213
        %s215 = sand.u32 %s137, 1
        %s216 = smul.addr %s215, 16
        %s217 = scalar_lea.vmem [#allocation4], %s216
        %p218 = scmp.lt.s32.totalorder %s19, 1
        %s219 = scalar_select %p218, %s19, 1
        %s220 = smul.addr %s219, 2
        %s221 = smul.addr %s220, 8
        %s222 = scalar_lea.vmem %s0, %s221
        %vm223 = vcmask 516096
        %224 = vst.msk [vmem:[#allocation2] sm:$0x1] %vm223, 0.0
        %225 = vst.msk [vmem:[#allocation2 + $0x11] sm:$0x1] %vm223, 0.0
        %226 = vst.msk [vmem:[#allocation3] sm:$0x1] %vm223, 0.0
        %227 = vst.msk [vmem:[#allocation3 + $0x11] sm:$0x1] %vm223, 0.0
        %v228 = vld [vmem:[%s222] sm:$0xff]
        %v229 = vld [vmem:[%s222 + $0x8] sm:$0xff]
        %v230 = vmax.f32 %v228, 0.0
        %v231 = vmax.f32 %v229, 0.0
        %vm232 = vcmask 523264
        %233 = vst.msk [vmem:[#allocation2 + $0x1] sm:$0xff] %vm232, %v230
        %234 = vst.msk [vmem:[#allocation2 + $0x9] sm:$0xff] %vm232, %v231
        %v235 = vld [vmem:[#allocation2] sm:$0xff]
        %v236 = vld [vmem:[#allocation2 + $0x8] sm:$0xff]
        %v237 = vld [vmem:[#allocation2 + $0x1] sm:$0xff]
        %v238 = vld [vmem:[#allocation2 + $0x9] sm:$0xff]
        %v239 = vld [vmem:[#allocation2 + $0x2] sm:$0xff]
        %v240 = vld [vmem:[#allocation2 + $0xa] sm:$0xff]
        %243 = vrot.lane.b32.xlu0 %v237, 64
        %v244 = vpop.permute.xlu0 %243
        %245 = vrot.lane.b32.xlu0 %v238, 64
        %v246 = vpop.permute.xlu0 %245
        %v249 = vsel %vm232, %v235, %v244
        %v250 = vsel %vm232, %v236, %v246
        %v251 = vld [vmem:[%s1] sm:$0xff]
        %v252 = vld [vmem:[%s1 + $0x8] sm:$0xff]
        %v253 = vld [vmem:[%s1 + $0x10] sm:$0xff]
        %v254 = vld [vmem:[%s1 + $0x18] sm:$0xff]
        %v255 = vld [vmem:[%s1 + $0x20] sm:$0xff]
        %v256 = vld [vmem:[%s1 + $0x28] sm:$0xff]
        %v257 = vld [vmem:[%s1 + $0x30] sm:$0xff]
        %v258 = vld [vmem:[%s1 + $0x38] sm:$0xff]
        %v259 = vld [vmem:[%s1 + $0x40] sm:$0xff]
        %v260 = vld [vmem:[%s1 + $0x48] sm:$0xff]
        %v261 = vld [vmem:[%s1 + $0x50] sm:$0xff]
        %v262 = vld [vmem:[%s1 + $0x58] sm:$0xff]
        %v263 = vld [vmem:[%s1 + $0x60] sm:$0xff]
        %v264 = vld [vmem:[%s1 + $0x68] sm:$0xff]
        %v265 = vld [vmem:[%s1 + $0x70] sm:$0xff]
        %v266 = vld [vmem:[%s1 + $0x78] sm:$0xff]
        %v267 = vld [vmem:[%s1 + $0x80] sm:$0xff]
        %v268 = vld [vmem:[%s1 + $0x88] sm:$0xff]
        %v269 = vld [vmem:[%s1 + $0x90] sm:$0xff]
        %v270 = vld [vmem:[%s1 + $0x98] sm:$0xff]
        %v271 = vld [vmem:[%s1 + $0xa0] sm:$0xff]
        %v272 = vld [vmem:[%s1 + $0xa8] sm:$0xff]
        %v273 = vld [vmem:[%s1 + $0xb0] sm:$0xff]
        %v274 = vld [vmem:[%s1 + $0xb8] sm:$0xff]
        %v275 = vld [vmem:[%s2] sm:$0x1]
        %v277 = vlaneseq
        %v278 = vshrl.u32 %v277, 7
        %v279 = vsub.s32 0, %v278
        %v280 = vrot.slane %v275, %v279
        %v283 = vsel %vm232, %v239, 0
        %v286 = vsel %vm232, %v240, 0
        %288 = vmatprep.subr.mxu0 0.0
        %289 = vmatpush1.msra.mxu0 %v266
        %290 = vmatprep.subr.mxu0 0.0
        %291 = vmatpush1.msra.mxu0 %v265
        %292 = vmatprep.subr.mxu0 0.0
        %293 = vmatpush1.msra.mxu0 %v264
        %294 = vmatprep.subr.mxu0 0.0
        %295 = vmatpush1.msra.mxu0 %v263
        %296 = vmatprep.subr.mxu0 0.0
        %297 = vmatpush1.msra.mxu0 %v262
        %298 = vmatprep.subr.mxu0 0.0
        %299 = vmatpush1.msra.mxu0 %v261
        %300 = vmatprep.subr.mxu0 0.0
        %301 = vmatpush1.msra.mxu0 %v260
        %302 = vmatprep.subr.mxu0 0.0
        %303 = vmatpush1.msra.mxu0 %v259
        %304 = vmatprep.subr.mxu0 0.0
        %305 = vmatpush1.msra.mxu0 %v258
        %306 = vmatprep.subr.mxu0 0.0
        %307 = vmatpush1.msra.mxu0 %v257
        %308 = vmatprep.subr.mxu0 0.0
        %309 = vmatpush1.msra.mxu0 %v256
        %310 = vmatprep.subr.mxu0 0.0
        %311 = vmatpush1.msra.mxu0 %v255
        %312 = vmatprep.subr.mxu0 0.0
        %313 = vmatpush1.msra.mxu0 %v254
        %314 = vmatprep.subr.mxu0 0.0
        %315 = vmatpush1.msra.mxu0 %v253
        %316 = vmatprep.subr.mxu0 0.0
        %317 = vmatpush1.msra.mxu0 %v252
        %318 = vmatprep.subr.mxu0 0.0
        %319 = vmatpush1.msra.mxu0 %v251
        %320 = vmatprep.subr.mxu0 0.0
        %321 = vmatpush2.msra.mxu0 0.0
        %322 = vmatprep.subr.mxu0 0.0
        %323 = vmatpush2.msra.mxu0 0.0
        %324 = vmatprep.subr.mxu0 0.0
        %325 = vmatpush2.msra.mxu0 0.0
        %326 = vmatprep.subr.mxu0 0.0
        %327 = vmatpush2.msra.mxu0 0.0
        %328 = vmatprep.subr.mxu0 0.0
        %329 = vmatpush2.msra.mxu0 0.0
        %330 = vmatprep.subr.mxu0 0.0
        %331 = vmatpush2.msra.mxu0 0.0
        %332 = vmatprep.subr.mxu0 0.0
        %333 = vmatpush2.msra.mxu0 0.0
        %334 = vmatprep.subr.mxu0 0.0
        %335 = vmatpush2.msra.mxu0 0.0
        %336 = vmatprep.subr.mxu0 0.0
        %337 = vmatpush2.msra.mxu0 %v274
        %338 = vmatprep.subr.mxu0 0.0
        %339 = vmatpush2.msra.mxu0 %v273
        %340 = vmatprep.subr.mxu0 0.0
        %341 = vmatpush2.msra.mxu0 %v272
        %342 = vmatprep.subr.mxu0 0.0
        %343 = vmatpush2.msra.mxu0 %v271
        %344 = vmatprep.subr.mxu0 0.0
        %345 = vmatpush2.msra.mxu0 %v270
        %346 = vmatprep.subr.mxu0 0.0
        %347 = vmatpush2.msra.mxu0 %v269
        %348 = vmatprep.subr.mxu0 0.0
        %349 = vmatpush2.msra.mxu0 %v268
        %350 = vmatprep.subr.mxu0 0.0
        %351 = vmatpush2.msra.mxu0 %v267
        %352 = vmatprep.mubr.f32.mxu0 %v283
        %353 = vmatmul.mubr.f32.gmra.mxu0 %v249
        %v354 = vpop.f32.mrf.mxu0
        %v355 = vadd.f32 %v280, %v354
        %v356 = vpop.f32.mrf.mxu0
        %357 = vmatprep.mubr.f32.mxu0 %v286
        %358 = vmatmul.mubr.f32.gmra.mxu0 %v250
        %v359 = vpop.f32.mrf.mxu0
        %v360 = vadd.f32 %v280, %v359
        %v361 = vpop.f32.mrf.mxu0
        %362 = vdwg.mxu0
        %v363 = vmax.f32 %v355, 0.0
        %v364 = vmax.f32 %v360, 0.0
        %365 = vst.msk [vmem:[#allocation3 + $0x1] sm:$0xff] %vm232, %v363
        %366 = vst.msk [vmem:[#allocation3 + $0x9] sm:$0xff] %vm232, %v364
        %v367 = vld [vmem:[#allocation3] sm:$0xff]
        %v368 = vld [vmem:[#allocation3 + $0x8] sm:$0xff]
        %v369 = vld [vmem:[#allocation3 + $0x1] sm:$0xff]
        %v370 = vld [vmem:[#allocation3 + $0x9] sm:$0xff]
        %v371 = vld [vmem:[#allocation3 + $0x2] sm:$0xff]
        %v372 = vld [vmem:[#allocation3 + $0xa] sm:$0xff]
        %375 = vrot.lane.b32.xlu0 %v369, 64
        %v376 = vpop.permute.xlu0 %375
        %377 = vrot.lane.b32.xlu0 %v370, 64
        %v378 = vpop.permute.xlu0 %377
        %v381 = vsel %vm232, %v367, %v376
        %v382 = vsel %vm232, %v368, %v378
        %v383 = vld [vmem:[%s3] sm:$0xff]
        %v384 = vld [vmem:[%s3 + $0x8] sm:$0xff]
        %v385 = vld [vmem:[%s3 + $0x10] sm:$0xff]
        %v386 = vld [vmem:[%s3 + $0x18] sm:$0xff]
        %v387 = vld [vmem:[%s3 + $0x20] sm:$0xff]
        %v388 = vld [vmem:[%s3 + $0x28] sm:$0xff]
        %v389 = vld [vmem:[%s3 + $0x30] sm:$0xff]
        %v390 = vld [vmem:[%s3 + $0x38] sm:$0xff]
        %v391 = vld [vmem:[%s3 + $0x40] sm:$0xff]
        %v392 = vld [vmem:[%s3 + $0x48] sm:$0xff]
        %v393 = vld [vmem:[%s3 + $0x50] sm:$0xff]
        %v394 = vld [vmem:[%s3 + $0x58] sm:$0xff]
        %v395 = vld [vmem:[%s3 + $0x60] sm:$0xff]
        %v396 = vld [vmem:[%s3 + $0x68] sm:$0xff]
        %v397 = vld [vmem:[%s3 + $0x70] sm:$0xff]
        %v398 = vld [vmem:[%s3 + $0x78] sm:$0xff]
        %v399 = vld [vmem:[%s3 + $0x80] sm:$0xff]
        %v400 = vld [vmem:[%s3 + $0x88] sm:$0xff]
        %v401 = vld [vmem:[%s3 + $0x90] sm:$0xff]
        %v402 = vld [vmem:[%s3 + $0x98] sm:$0xff]
        %v403 = vld [vmem:[%s3 + $0xa0] sm:$0xff]
        %v404 = vld [vmem:[%s3 + $0xa8] sm:$0xff]
        %v405 = vld [vmem:[%s3 + $0xb0] sm:$0xff]
        %v406 = vld [vmem:[%s3 + $0xb8] sm:$0xff]
        %v407 = vld [vmem:[%s4] sm:$0x1]
        %v409 = vlaneseq
        %v410 = vshrl.u32 %v409, 7
        %v411 = vsub.s32 0, %v410
        %v412 = vrot.slane %v407, %v411
        %v415 = vsel %vm232, %v371, 0
        %v418 = vsel %vm232, %v372, 0
        %420 = vmatprep.subr.mxu0 0.0
        %421 = vmatpush1.msra.mxu0 %v398
        %422 = vmatprep.subr.mxu0 0.0
        %423 = vmatpush1.msra.mxu0 %v397
        %424 = vmatprep.subr.mxu0 0.0
        %425 = vmatpush1.msra.mxu0 %v396
        %426 = vmatprep.subr.mxu0 0.0
        %427 = vmatpush1.msra.mxu0 %v395
        %428 = vmatprep.subr.mxu0 0.0
        %429 = vmatpush1.msra.mxu0 %v394
        %430 = vmatprep.subr.mxu0 0.0
        %431 = vmatpush1.msra.mxu0 %v393
        %432 = vmatprep.subr.mxu0 0.0
        %433 = vmatpush1.msra.mxu0 %v392
        %434 = vmatprep.subr.mxu0 0.0
        %435 = vmatpush1.msra.mxu0 %v391
        %436 = vmatprep.subr.mxu0 0.0
        %437 = vmatpush1.msra.mxu0 %v390
        %438 = vmatprep.subr.mxu0 0.0
        %439 = vmatpush1.msra.mxu0 %v389
        %440 = vmatprep.subr.mxu0 0.0
        %441 = vmatpush1.msra.mxu0 %v388
        %442 = vmatprep.subr.mxu0 0.0
        %443 = vmatpush1.msra.mxu0 %v387
        %444 = vmatprep.subr.mxu0 0.0
        %445 = vmatpush1.msra.mxu0 %v386
        %446 = vmatprep.subr.mxu0 0.0
        %447 = vmatpush1.msra.mxu0 %v385
        %448 = vmatprep.subr.mxu0 0.0
        %449 = vmatpush1.msra.mxu0 %v384
        %450 = vmatprep.subr.mxu0 0.0
        %451 = vmatpush1.msra.mxu0 %v383
        %452 = vmatprep.subr.mxu0 0.0
        %453 = vmatpush2.msra.mxu0 0.0
        %454 = vmatprep.subr.mxu0 0.0
        %455 = vmatpush2.msra.mxu0 0.0
        %456 = vmatprep.subr.mxu0 0.0
        %457 = vmatpush2.msra.mxu0 0.0
        %458 = vmatprep.subr.mxu0 0.0
        %459 = vmatpush2.msra.mxu0 0.0
        %460 = vmatprep.subr.mxu0 0.0
        %461 = vmatpush2.msra.mxu0 0.0
        %462 = vmatprep.subr.mxu0 0.0
        %463 = vmatpush2.msra.mxu0 0.0
        %464 = vmatprep.subr.mxu0 0.0
        %465 = vmatpush2.msra.mxu0 0.0
        %466 = vmatprep.subr.mxu0 0.0
        %467 = vmatpush2.msra.mxu0 0.0
        %468 = vmatprep.subr.mxu0 0.0
        %469 = vmatpush2.msra.mxu0 %v406
        %470 = vmatprep.subr.mxu0 0.0
        %471 = vmatpush2.msra.mxu0 %v405
        %472 = vmatprep.subr.mxu0 0.0
        %473 = vmatpush2.msra.mxu0 %v404
        %474 = vmatprep.subr.mxu0 0.0
        %475 = vmatpush2.msra.mxu0 %v403
        %476 = vmatprep.subr.mxu0 0.0
        %477 = vmatpush2.msra.mxu0 %v402
        %478 = vmatprep.subr.mxu0 0.0
        %479 = vmatpush2.msra.mxu0 %v401
        %480 = vmatprep.subr.mxu0 0.0
        %481 = vmatpush2.msra.mxu0 %v400
        %482 = vmatprep.subr.mxu0 0.0
        %483 = vmatpush2.msra.mxu0 %v399
        %484 = vmatprep.mubr.f32.mxu0 %v415
        %485 = vmatmul.mubr.f32.gmra.mxu0 %v381
        %v486 = vpop.f32.mrf.mxu0
        %v487 = vadd.f32 %v412, %v486
        %v488 = vpop.f32.mrf.mxu0
        %489 = vmatprep.mubr.f32.mxu0 %v418
        %490 = vmatmul.mubr.f32.gmra.mxu0 %v382
        %v491 = vpop.f32.mrf.mxu0
        %v492 = vadd.f32 %v412, %v491
        %v493 = vpop.f32.mrf.mxu0
        %494 = vdwg.mxu0
        %v495 = vadd.f32 %v228, %v487
        %v496 = vadd.f32 %v229, %v492
        %497 = vst.msk [vmem:[%s217] sm:$0xff] %vm232, %v495
        %498 = vst.msk [vmem:[%s217 + $0x8] sm:$0xff] %vm232, %v496
        %s499 = sand.u32 %s137, 1
        %s500 = scalar_lea.sflag [#allocation5], %s499
        %s501 = sand.u32 %s137, 1
        %s502 = smul.addr %s501, 16
        %s503 = scalar_lea.vmem [#allocation4], %s502
        // Predicated region
        $region41: #{tpu_custom_call.1} parent=39 // pred_check
          %p504 = pneg %p147
        $region42: #{tpu_custom_call.1} parent=39 // pred_check_branch
          %506 = sbr.rel (%p504) target = $region44
        $region43: #{tpu_custom_call.1} parent=39 // pred_region
          %s508 = ssub.s32 256, 256
          %509 = vsyncadd %s500, %s508
          %s510 = smul.addr %s19, 2
          %s511 = smul.addr %s510, 128
          %s512 = scalar_lea.hbm %s5, %s511
          %s513 = sshll.u32 %s503, 4
          %s514 = int_to_ptr.vmem [resolvable:$true] %s513
          %519 = dma.vmem_to_hbm [thread:$0]  %s514, 256, %s512, %s500, 128, 128, 8
        $region44: #{tpu_custom_call.1} parent=39 // pred_fallthru
          _
      $region40: #{tpu_custom_call.1} parent=5 // pred_fallthru
        _
      %p520 = scmp.le.s32.totalorder 2, %s14
      // Predicated region
      $region45: #{tpu_custom_call.1} parent=5 // pred_check
        %p521 = pneg %p520
      $region46: #{tpu_custom_call.1} parent=5 // pred_check_branch
        %523 = sbr.rel (%p521) target = $region48
      $region47: #{tpu_custom_call.1} parent=5 // pred_region
        %s524 = ssub.s32 %s14, 2
        // Predicated region
        $region49: #{tpu_custom_call.1} parent=47 // pred_check
          %p525 = pneg %p153
        $region50: #{tpu_custom_call.1} parent=47 // pred_check_branch
          %527 = sbr.rel (%p525) target = $region52
        $region51: #{tpu_custom_call.1} parent=47 // pred_region
          %s528 = sand.u32 %s138, 1
          %s529 = scalar_lea.sflag [#allocation5], %s528
          %s530 = sand.u32 %s138, 1
          %s531 = smul.addr %s530, 16
          %s532 = scalar_lea.vmem [#allocation4], %s531
          %533 = dma.done %s529, 256
        $region52: #{tpu_custom_call.1} parent=47 // pred_fallthru
          _
      $region48: #{tpu_custom_call.1} parent=5 // pred_fallthru
        _
    $region6: #{tpu_custom_call.1} parent=1 // loop_footer
      %s18 = sadd.s32 1, %s14
    $region7: #{tpu_custom_call.1} parent=1 // loop_footer_branch
      %13 = sbr.rel target = $region3
    $region8: #{tpu_custom_call.1} parent=1 // loop_exit
      _
    %534 = vsyncpa [#allocation5], 1
    %s535 = scalar_lea.sflag [#allocation5], 1
    %536 = vsyncpa %s535, 1

</llo_original>
